<compile_context>
chip_gen: v5e
topology: v5e:2x2
jax: 0.10.0
libtpu: 0.0.40
codegen_flags: <defaults>
</compile_context>

<pallas_src>
import jax
import jax.numpy as jnp
from jax.experimental import pallas as pl
from jax.experimental.pallas import tpu as pltpu

_PALLAS_MIN_BYTES = 256 * 1024          # below this, XLA's fused multiply wins
_BLOCK_TARGET_BYTES = 2 * 1024 * 1024   # ~2 MiB per block (HBM roofline knee)


def _scale_kernel(factor_ref, x_ref, o_ref):
    # factor_ref: (1,) float32 scalar in SMEM.  Multiply in f32 (matches
    # PyTorch's f32-parameter multiply for low-precision inputs); the casts
    # are no-ops for f32 and free filler otherwise — this kernel is
    # HBM/vld/vst bound, and a bf16-native multiply (v6e/v7x) would not move
    # wall time while being unsupported on v5e's VALU.
    f = factor_ref[0]
    o_ref[...] = (x_ref[...].astype(jnp.float32) * f).astype(o_ref.dtype)


def _xla_multiply(x, factor):
    # Tiny-input / unaligned-tail fallback: one fused elementwise HBM pass.
    f = jnp.asarray(factor, dtype=jnp.float32).reshape(-1)[0]
    return (x.astype(jnp.float32) * f).astype(x.dtype)


def _scalar_multiply(x, factor, *, donate_x=False):
    """x * factor via Pallas: lane-dense (rows, lane) layout + parallel row grid."""
    n = x.size
    itemsize = x.dtype.itemsize

    if n == 0 or n * itemsize < _PALLAS_MIN_BYTES:
        return _xla_multiply(x, factor)

    # Largest lane width (multiple of 128) dividing n exactly -> no padding.
    lane = None
    for cand in (1024, 512, 256, 128):
        if n % cand == 0:
            lane = cand
            break
    if lane is None:
        # TODO(synk): split off the <128-element tail and run Pallas on the
        # aligned body instead of falling back for the whole tensor.
        return _xla_multiply(x, factor)

    rows = n // lane
    x2d = x.reshape(rows, lane)
    factor_f32 = jnp.asarray(factor, dtype=jnp.float32).reshape((1,))

    # ~2 MiB blocks, multiple of 8 rows, never (meaningfully) larger than the
    # array; ragged last grid block is masked by Pallas automatically.
    rows8 = ((rows + 7) // 8) * 8
    block_rows = max(8, (_BLOCK_TARGET_BYTES // (lane * itemsize)) // 8 * 8)
    block_rows = min(block_rows, rows8)
    grid = (pl.cdiv(rows, block_rows),)

    # Output buffer reuses x's HBM buffer when the caller donates x.
    io_aliases = {1: 0} if donate_x else {}

    out2d = pl.pallas_call(
        _scale_kernel,
        out_shape=jax.ShapeDtypeStruct(x2d.shape, x2d.dtype),
        grid=grid,
        in_specs=[
            pl.BlockSpec(memory_space=pltpu.MemorySpace.SMEM),    # factor (scalar)
            pl.BlockSpec((block_rows, lane), lambda i: (i, 0)),   # x tile
        ],
        out_specs=pl.BlockSpec((block_rows, lane), lambda i: (i, 0)),
        input_output_aliases=io_aliases,
        compiler_params=pltpu.CompilerParams(
            dimension_semantics=("parallel",)),
    )(factor_f32, x2d)

    return out2d.reshape(x.shape)


def identity_inverse_forward(x, factor, *, multiply_forward=False, donate_x=False):
    """Pallas implementation of IdentityInverse.forward.

    x: any-shape array (NCHW in the test). factor: (1,) learnable scalar (init ones(1)).
    """
    if not multiply_forward:
        # Pure identity: no compute, no HBM traffic — bypass Pallas entirely.
        return x
    return _scalar_multiply(x, factor, donate_x=donate_x)


def identity_inverse_inverse(y, factor, *, multiply_inverse=False, donate_x=False):
    """Pallas implementation of IdentityInverse.inverse (same structure)."""
    return identity_inverse_forward(
        y, factor, multiply_forward=multiply_inverse, donate_x=donate_x)


if __name__ == "__main__":
    key = jax.random.PRNGKey(0)
    k1, k2, k3 = jax.random.split(key, 3)

    factor_init = jnp.ones((1,), dtype=jnp.float32)   # torch.ones(1)

    # --- Small NCHW input from the test module: batch=2, channels=4, 16x16 ---
    x_small = jax.random.normal(k1, (2, 4, 16, 16), dtype=jnp.float32)

    # multiply_forward=False: pure identity (no kernel, no HBM traffic).
    out_id = identity_inverse_forward(x_small, factor_init, multiply_forward=False)
    jax.block_until_ready(out_id)
    assert out_id.shape == x_small.shape and out_id.dtype == x_small.dtype
    assert jnp.allclose(out_id, x_small)

    # multiply_forward=True on the tiny shape: takes the XLA fast path (8 KiB).
    out_small = identity_inverse_forward(x_small, factor_init, multiply_forward=True)
    jax.block_until_ready(out_small)
    assert out_small.shape == x_small.shape and out_small.dtype == x_small.dtype
    assert jnp.allclose(out_small, x_small)

    # --- Mid-size input: Pallas path, single exact (240, 1024) block ---
    factor_a = jnp.array([2.5], dtype=jnp.float32)
    x_mid = jax.random.normal(k2, (3, 4, 160, 128), dtype=jnp.float32)
    expected_mid = x_mid * 2.5                       # computed before the kernel call
    out_mid = identity_inverse_forward(x_mid, factor_a, multiply_forward=True)
    jax.block_until_ready(out_mid)
    assert out_mid.shape == x_mid.shape and out_mid.dtype == x_mid.dtype
    assert jnp.allclose(out_mid, expected_mid, rtol=1e-6, atol=1e-6)

    # --- Larger input: Pallas path, 2-step row grid with a ragged masked last
    #     block (640 rows, 512-row blocks), demonstrating donate_x aliasing ---
    factor_b = jnp.array([0.5], dtype=jnp.float32)
    x_big = jax.random.normal(k3, (10, 64, 32, 32), dtype=jnp.float32)
    expected_big = x_big * 0.5                       # computed before the kernel call
    out_big = identity_inverse_inverse(
        x_big, factor_b, multiply_inverse=True, donate_x=True)
    jax.block_until_ready(out_big)
    assert out_big.shape == x_big.shape and out_big.dtype == x_big.dtype
    assert jnp.allclose(out_big, expected_big, rtol=1e-6, atol=1e-6)

    print("KERNEL_OK")
</pallas_src>

<mosaic_0001>
module attributes {stable_mosaic.version = 11 : i64} {
  func.func @_scale_kernel(%arg0: i32, %arg1: memref<1xf32, #tpu.memory_space<smem>>, %arg2: memref<240x1024xf32, #tpu.memory_space<vmem>>, %arg3: memref<240x1024xf32, #tpu.memory_space<vmem>>) attributes {dimension_semantics = [#tpu.dimension_semantics<parallel>], iteration_bounds = array<i64: 1>, scalar_prefetch = 0 : i64, scratch_operands = 0 : i64, tpu.core_type = #tpu.core_type<tc>, window_params = [{transform_indices = @transform_0, window_bounds = array<i64: 1>}, {transform_indices = @transform_1, window_bounds = array<i64: 240, 1024>}, {transform_indices = @transform_2, window_bounds = array<i64: 240, 1024>}]} {
    %c0 = arith.constant 0 : index
    %0 = memref.load %arg1[%c0] : memref<1xf32, #tpu.memory_space<smem>>
    %c0_0 = arith.constant 0 : index
    %c0_1 = arith.constant 0 : index
    %1 = vector.load %arg2[%c0_0, %c0_1] : memref<240x1024xf32, #tpu.memory_space<vmem>>, vector<240x1024xf32>
    %2 = vector.broadcast %0 : f32 to vector<240x1024xf32>
    %3 = arith.mulf %1, %2 : vector<240x1024xf32>
    %c0_2 = arith.constant 0 : index
    %c0_3 = arith.constant 0 : index
    %4 = vector.load %arg3[%c0_2, %c0_3] : memref<240x1024xf32, #tpu.memory_space<vmem>>, vector<240x1024xf32>
    tpu.vector_store %arg3[%c0_2, %c0_3], %3 {strides = array<i32>} : memref<240x1024xf32, #tpu.memory_space<vmem>>, vector<240x1024xf32>,
    return
  }
  func.func @transform_0(%arg0: i32) -> i32 {
    %c0_i32 = arith.constant 0 : i32
    %c0_i32_0 = arith.constant 0 : i32
    return %c0_i32 : i32
  }
  func.func @transform_1(%arg0: i32) -> (i32, i32) {
    %c0_i32 = arith.constant 0 : i32
    %c0_i32_0 = arith.constant 0 : i32
    return %arg0, %c0_i32 : i32, i32
  }
  func.func @transform_2(%arg0: i32) -> (i32, i32) {
    %c0_i32 = arith.constant 0 : i32
    %c0_i32_0 = arith.constant 0 : i32
    return %arg0, %c0_i32 : i32, i32
  }
}

</mosaic_0001>

<llo_original>
// kernel: tpu_custom_call.1
$region0: #{tpu_custom_call.1}
  #allocation0 [shape = 'u32[]', space=smem, size = 0x4, offset = 0x4, fixed_abs, tag = 'smem constant byte address 0x4 - core index']
  #allocation1 [shape = 'u32[72,128]{1,0:T(1,128)}', space=vmem, size = 0x9000, scoped, tag = 'internal scratch']
  #allocation2 [shape = 'f32[1]{0:T(128)S(6)}', space=smem, size = 0x200, scoped, tag = 'scoped memory for tpu_custom_call.1']
  %s0 = inlined_call_operand.<no memory space> [shape: f32[1], index: 0, kind: input, shape index: {}]
  %s1 = inlined_call_operand.hbm [shape: f32[240,1024], index: 1, kind: input, shape index: {}]
  %s2 = inlined_call_operand.hbm [shape: f32[240,1024], index: 2, kind: output, shape index: {}]
  %s3 = sld [smem:[#allocation0]]
  $region22: #{tpu_custom_call.1} parent=0
    _
  %s5 = ssub.s32 1, %s3
  %s6 = scalar_select 0, %s5, %s3
  %7 = sst [smem:[#allocation2]] %s0
  $region1: #{tpu_custom_call.1} parent=0
    #allocation3 [shape = 'u8[983040]{0}', space=vmem, size = 0xf0000, scoped, tag = 'input window, operand 1, single buffered']
    #allocation4 [shape = 's32[1]{0}', space=sflag, size = 0x4, scoped, tag = 'scoped memory for tpu_custom_call.1']
    #allocation5 [shape = 's32[1]{0}', space=sflag, size = 0x4, scoped, tag = 'scoped memory for tpu_custom_call.1']
    #allocation6 [shape = 'u8[983040]{0}', space=vmem, size = 0xf0000, scoped, tag = 'output window, operand 0, single buffered']
    %8 = vsyncpa [#allocation4], 0
    %9 = vsyncpa [#allocation5], 0
    // Predicated region
    $region2: #{tpu_custom_call.1} parent=1 // pred_check
      _
    $region3: #{tpu_custom_call.1} parent=1 // pred_check_branch
      %11 = sbr.rel (0) target = $region5
    $region4: #{tpu_custom_call.1} parent=1 // pred_region
      _
    $region5: #{tpu_custom_call.1} parent=1 // pred_fallthru
      _
    // Predicated region
    $region6: #{tpu_custom_call.1} parent=1 // pred_check
      _
    $region7: #{tpu_custom_call.1} parent=1 // pred_check_branch
      %13 = sbr.rel (0) target = $region9
    $region8: #{tpu_custom_call.1} parent=1 // pred_region
      %15 = vsyncadd [#allocation4], 0
      %s16 = sshll.u32 %s1, 4
      %s17 = int_to_ptr.hbm [resolvable:$true] %s16
      %s18 = sshll.u32 [#allocation3], 4
      %s19 = int_to_ptr.vmem [resolvable:$true] %s18
      %24 = dma.hbm_to_vmem [thread:$0]  %s17, 30720, %s19, [#allocation4], 1024, 1024, 64
    $region9: #{tpu_custom_call.1} parent=1 // pred_fallthru
      _
    // Predicated region
    $region10: #{tpu_custom_call.1} parent=1 // pred_check
      _
    $region11: #{tpu_custom_call.1} parent=1 // pred_check_branch
      %26 = sbr.rel (0) target = $region13
    $region12: #{tpu_custom_call.1} parent=1 // pred_region
      %28 = dma.done [#allocation4], 30720
    $region13: #{tpu_custom_call.1} parent=1 // pred_fallthru
      _
    %s29 = sld [smem:[#allocation2]]
    %v30 = vld [vmem:[#allocation3] sm:$0xff]
    %v31 = vld [vmem:[#allocation3 + $0x8] sm:$0xff]
    %v32 = vld [vmem:[#allocation3 + $0x10] sm:$0xff]
    %v33 = vld [vmem:[#allocation3 + $0x18] sm:$0xff]
    %v34 = vld [vmem:[#allocation3 + $0x20] sm:$0xff]
    %v35 = vld [vmem:[#allocation3 + $0x28] sm:$0xff]
    %v36 = vld [vmem:[#allocation3 + $0x30] sm:$0xff]
    %v37 = vld [vmem:[#allocation3 + $0x38] sm:$0xff]
    %v38 = vld [vmem:[#allocation3 + $0x40] sm:$0xff]
    %v39 = vld [vmem:[#allocation3 + $0x48] sm:$0xff]
    %v40 = vld [vmem:[#allocation3 + $0x50] sm:$0xff]
    %v41 = vld [vmem:[#allocation3 + $0x58] sm:$0xff]
    %v42 = vld [vmem:[#allocation3 + $0x60] sm:$0xff]
    %v43 = vld [vmem:[#allocation3 + $0x68] sm:$0xff]
    %v44 = vld [vmem:[#allocation3 + $0x70] sm:$0xff]
    %v45 = vld [vmem:[#allocation3 + $0x78] sm:$0xff]
    %v46 = vld [vmem:[#allocation3 + $0x80] sm:$0xff]
    %v47 = vld [vmem:[#allocation3 + $0x88] sm:$0xff]
    %v48 = vld [vmem:[#allocation3 + $0x90] sm:$0xff]
    %v49 = vld [vmem:[#allocation3 + $0x98] sm:$0xff]
    %v50 = vld [vmem:[#allocation3 + $0xa0] sm:$0xff]
    %v51 = vld [vmem:[#allocation3 + $0xa8] sm:$0xff]
    %v52 = vld [vmem:[#allocation3 + $0xb0] sm:$0xff]
    %v53 = vld [vmem:[#allocation3 + $0xb8] sm:$0xff]
    %v54 = vld [vmem:[#allocation3 + $0xc0] sm:$0xff]
    %v55 = vld [vmem:[#allocation3 + $0xc8] sm:$0xff]
    %v56 = vld [vmem:[#allocation3 + $0xd0] sm:$0xff]
    %v57 = vld [vmem:[#allocation3 + $0xd8] sm:$0xff]
    %v58 = vld [vmem:[#allocation3 + $0xe0] sm:$0xff]
    %v59 = vld [vmem:[#allocation3 + $0xe8] sm:$0xff]
    %v60 = vld [vmem:[#allocation3 + $0xf0] sm:$0xff]
    %v61 = vld [vmem:[#allocation3 + $0xf8] sm:$0xff]
    %v62 = vld [vmem:[#allocation3 + $0x100] sm:$0xff]
    %v63 = vld [vmem:[#allocation3 + $0x108] sm:$0xff]
    %v64 = vld [vmem:[#allocation3 + $0x110] sm:$0xff]
    %v65 = vld [vmem:[#allocation3 + $0x118] sm:$0xff]
    %v66 = vld [vmem:[#allocation3 + $0x120] sm:$0xff]
    %v67 = vld [vmem:[#allocation3 + $0x128] sm:$0xff]
    %v68 = vld [vmem:[#allocation3 + $0x130] sm:$0xff]
    %v69 = vld [vmem:[#allocation3 + $0x138] sm:$0xff]
    %v70 = vld [vmem:[#allocation3 + $0x140] sm:$0xff]
    %v71 = vld [vmem:[#allocation3 + $0x148] sm:$0xff]
    %v72 = vld [vmem:[#allocation3 + $0x150] sm:$0xff]
    %v73 = vld [vmem:[#allocation3 + $0x158] sm:$0xff]
    %v74 = vld [vmem:[#allocation3 + $0x160] sm:$0xff]
    %v75 = vld [vmem:[#allocation3 + $0x168] sm:$0xff]
    %v76 = vld [vmem:[#allocation3 + $0x170] sm:$0xff]
    %v77 = vld [vmem:[#allocation3 + $0x178] sm:$0xff]
    %v78 = vld [vmem:[#allocation3 + $0x180] sm:$0xff]
    %v79 = vld [vmem:[#allocation3 + $0x188] sm:$0xff]
    %v80 = vld [vmem:[#allocation3 + $0x190] sm:$0xff]
    %v81 = vld [vmem:[#allocation3 + $0x198] sm:$0xff]
    %v82 = vld [vmem:[#allocation3 + $0x1a0] sm:$0xff]
    %v83 = vld [vmem:[#allocation3 + $0x1a8] sm:$0xff]
    %v84 = vld [vmem:[#allocation3 + $0x1b0] sm:$0xff]
    %v85 = vld [vmem:[#allocation3 + $0x1b8] sm:$0xff]
    %v86 = vld [vmem:[#allocation3 + $0x1c0] sm:$0xff]
    %v87 = vld [vmem:[#allocation3 + $0x1c8] sm:$0xff]
    %v88 = vld [vmem:[#allocation3 + $0x1d0] sm:$0xff]
    %v89 = vld [vmem:[#allocation3 + $0x1d8] sm:$0xff]
    %v90 = vld [vmem:[#allocation3 + $0x1e0] sm:$0xff]
    %v91 = vld [vmem:[#allocation3 + $0x1e8] sm:$0xff]
    %v92 = vld [vmem:[#allocation3 + $0x1f0] sm:$0xff]
    %v93 = vld [vmem:[#allocation3 + $0x1f8] sm:$0xff]
    %v94 = vld [vmem:[#allocation3 + $0x200] sm:$0xff]
    %v95 = vld [vmem:[#allocation3 + $0x208] sm:$0xff]
    %v96 = vld [vmem:[#allocation3 + $0x210] sm:$0xff]
    %v97 = vld [vmem:[#allocation3 + $0x218] sm:$0xff]
    %v98 = vld [vmem:[#allocation3 + $0x220] sm:$0xff]
    %v99 = vld [vmem:[#allocation3 + $0x228] sm:$0xff]
    %v100 = vld [vmem:[#allocation3 + $0x230] sm:$0xff]
    %v101 = vld [vmem:[#allocation3 + $0x238] sm:$0xff]
    %v102 = vld [vmem:[#allocation3 + $0x240] sm:$0xff]
    %v103 = vld [vmem:[#allocation3 + $0x248] sm:$0xff]
    %v104 = vld [vmem:[#allocation3 + $0x250] sm:$0xff]
    %v105 = vld [vmem:[#allocation3 + $0x258] sm:$0xff]
    %v106 = vld [vmem:[#allocation3 + $0x260] sm:$0xff]
    %v107 = vld [vmem:[#allocation3 + $0x268] sm:$0xff]
    %v108 = vld [vmem:[#allocation3 + $0x270] sm:$0xff]
    %v109 = vld [vmem:[#allocation3 + $0x278] sm:$0xff]
    %v110 = vld [vmem:[#allocation3 + $0x280] sm:$0xff]
    %v111 = vld [vmem:[#allocation3 + $0x288] sm:$0xff]
    %v112 = vld [vmem:[#allocation3 + $0x290] sm:$0xff]
    %v113 = vld [vmem:[#allocation3 + $0x298] sm:$0xff]
    %v114 = vld [vmem:[#allocation3 + $0x2a0] sm:$0xff]
    %v115 = vld [vmem:[#allocation3 + $0x2a8] sm:$0xff]
    %v116 = vld [vmem:[#allocation3 + $0x2b0] sm:$0xff]
    %v117 = vld [vmem:[#allocation3 + $0x2b8] sm:$0xff]
    %v118 = vld [vmem:[#allocation3 + $0x2c0] sm:$0xff]
    %v119 = vld [vmem:[#allocation3 + $0x2c8] sm:$0xff]
    %v120 = vld [vmem:[#allocation3 + $0x2d0] sm:$0xff]
    %v121 = vld [vmem:[#allocation3 + $0x2d8] sm:$0xff]
    %v122 = vld [vmem:[#allocation3 + $0x2e0] sm:$0xff]
    %v123 = vld [vmem:[#allocation3 + $0x2e8] sm:$0xff]
    %v124 = vld [vmem:[#allocation3 + $0x2f0] sm:$0xff]
    %v125 = vld [vmem:[#allocation3 + $0x2f8] sm:$0xff]
    %v126 = vld [vmem:[#allocation3 + $0x300] sm:$0xff]
    %v127 = vld [vmem:[#allocation3 + $0x308] sm:$0xff]
    %v128 = vld [vmem:[#allocation3 + $0x310] sm:$0xff]
    %v129 = vld [vmem:[#allocation3 + $0x318] sm:$0xff]
    %v130 = vld [vmem:[#allocation3 + $0x320] sm:$0xff]
    %v131 = vld [vmem:[#allocation3 + $0x328] sm:$0xff]
    %v132 = vld [vmem:[#allocation3 + $0x330] sm:$0xff]
    %v133 = vld [vmem:[#allocation3 + $0x338] sm:$0xff]
    %v134 = vld [vmem:[#allocation3 + $0x340] sm:$0xff]
    %v135 = vld [vmem:[#allocation3 + $0x348] sm:$0xff]
    %v136 = vld [vmem:[#allocation3 + $0x350] sm:$0xff]
    %v137 = vld [vmem:[#allocation3 + $0x358] sm:$0xff]
    %v138 = vld [vmem:[#allocation3 + $0x360] sm:$0xff]
    %v139 = vld [vmem:[#allocation3 + $0x368] sm:$0xff]
    %v140 = vld [vmem:[#allocation3 + $0x370] sm:$0xff]
    %v141 = vld [vmem:[#allocation3 + $0x378] sm:$0xff]
    %v142 = vld [vmem:[#allocation3 + $0x380] sm:$0xff]
    %v143 = vld [vmem:[#allocation3 + $0x388] sm:$0xff]
    %v144 = vld [vmem:[#allocation3 + $0x390] sm:$0xff]
    %v145 = vld [vmem:[#allocation3 + $0x398] sm:$0xff]
    %v146 = vld [vmem:[#allocation3 + $0x3a0] sm:$0xff]
    %v147 = vld [vmem:[#allocation3 + $0x3a8] sm:$0xff]
    %v148 = vld [vmem:[#allocation3 + $0x3b0] sm:$0xff]
    %v149 = vld [vmem:[#allocation3 + $0x3b8] sm:$0xff]
    %v150 = vld [vmem:[#allocation3 + $0x3c0] sm:$0xff]
    %v151 = vld [vmem:[#allocation3 + $0x3c8] sm:$0xff]
    %v152 = vld [vmem:[#allocation3 + $0x3d0] sm:$0xff]
    %v153 = vld [vmem:[#allocation3 + $0x3d8] sm:$0xff]
    %v154 = vld [vmem:[#allocation3 + $0x3e0] sm:$0xff]
    %v155 = vld [vmem:[#allocation3 + $0x3e8] sm:$0xff]
    %v156 = vld [vmem:[#allocation3 + $0x3f0] sm:$0xff]
    %v157 = vld [vmem:[#allocation3 + $0x3f8] sm:$0xff]
    %v158 = vld [vmem:[#allocation3 + $0x400] sm:$0xff]
    %v159 = vld [vmem:[#allocation3 + $0x408] sm:$0xff]
    %v160 = vld [vmem:[#allocation3 + $0x410] sm:$0xff]
    %v161 = vld [vmem:[#allocation3 + $0x418] sm:$0xff]
    %v162 = vld [vmem:[#allocation3 + $0x420] sm:$0xff]
    %v163 = vld [vmem:[#allocation3 + $0x428] sm:$0xff]
    %v164 = vld [vmem:[#allocation3 + $0x430] sm:$0xff]
    %v165 = vld [vmem:[#allocation3 + $0x438] sm:$0xff]
    %v166 = vld [vmem:[#allocation3 + $0x440] sm:$0xff]
    %v167 = vld [vmem:[#allocation3 + $0x448] sm:$0xff]
    %v168 = vld [vmem:[#allocation3 + $0x450] sm:$0xff]
    %v169 = vld [vmem:[#allocation3 + $0x458] sm:$0xff]
    %v170 = vld [vmem:[#allocation3 + $0x460] sm:$0xff]
    %v171 = vld [vmem:[#allocation3 + $0x468] sm:$0xff]
    %v172 = vld [vmem:[#allocation3 + $0x470] sm:$0xff]
    %v173 = vld [vmem:[#allocation3 + $0x478] sm:$0xff]
    %v174 = vld [vmem:[#allocation3 + $0x480] sm:$0xff]
    %v175 = vld [vmem:[#allocation3 + $0x488] sm:$0xff]
    %v176 = vld [vmem:[#allocation3 + $0x490] sm:$0xff]
    %v177 = vld [vmem:[#allocation3 + $0x498] sm:$0xff]
    %v178 = vld [vmem:[#allocation3 + $0x4a0] sm:$0xff]
    %v179 = vld [vmem:[#allocation3 + $0x4a8] sm:$0xff]
    %v180 = vld [vmem:[#allocation3 + $0x4b0] sm:$0xff]
    %v181 = vld [vmem:[#allocation3 + $0x4b8] sm:$0xff]
    %v182 = vld [vmem:[#allocation3 + $0x4c0] sm:$0xff]
    %v183 = vld [vmem:[#allocation3 + $0x4c8] sm:$0xff]
    %v184 = vld [vmem:[#allocation3 + $0x4d0] sm:$0xff]
    %v185 = vld [vmem:[#allocation3 + $0x4d8] sm:$0xff]
    %v186 = vld [vmem:[#allocation3 + $0x4e0] sm:$0xff]
    %v187 = vld [vmem:[#allocation3 + $0x4e8] sm:$0xff]
    %v188 = vld [vmem:[#allocation3 + $0x4f0] sm:$0xff]
    %v189 = vld [vmem:[#allocation3 + $0x4f8] sm:$0xff]
    %v190 = vld [vmem:[#allocation3 + $0x500] sm:$0xff]
    %v191 = vld [vmem:[#allocation3 + $0x508] sm:$0xff]
    %v192 = vld [vmem:[#allocation3 + $0x510] sm:$0xff]
    %v193 = vld [vmem:[#allocation3 + $0x518] sm:$0xff]
    %v194 = vld [vmem:[#allocation3 + $0x520] sm:$0xff]
    %v195 = vld [vmem:[#allocation3 + $0x528] sm:$0xff]
    %v196 = vld [vmem:[#allocation3 + $0x530] sm:$0xff]
    %v197 = vld [vmem:[#allocation3 + $0x538] sm:$0xff]
    %v198 = vld [vmem:[#allocation3 + $0x540] sm:$0xff]
    %v199 = vld [vmem:[#allocation3 + $0x548] sm:$0xff]
    %v200 = vld [vmem:[#allocation3 + $0x550] sm:$0xff]
    %v201 = vld [vmem:[#allocation3 + $0x558] sm:$0xff]
    %v202 = vld [vmem:[#allocation3 + $0x560] sm:$0xff]
    %v203 = vld [vmem:[#allocation3 + $0x568] sm:$0xff]
    %v204 = vld [vmem:[#allocation3 + $0x570] sm:$0xff]
    %v205 = vld [vmem:[#allocation3 + $0x578] sm:$0xff]
    %v206 = vld [vmem:[#allocation3 + $0x580] sm:$0xff]
    %v207 = vld [vmem:[#allocation3 + $0x588] sm:$0xff]
    %v208 = vld [vmem:[#allocation3 + $0x590] sm:$0xff]
    %v209 = vld [vmem:[#allocation3 + $0x598] sm:$0xff]
    %v210 = vld [vmem:[#allocation3 + $0x5a0] sm:$0xff]
    %v211 = vld [vmem:[#allocation3 + $0x5a8] sm:$0xff]
    %v212 = vld [vmem:[#allocation3 + $0x5b0] sm:$0xff]
    %v213 = vld [vmem:[#allocation3 + $0x5b8] sm:$0xff]
    %v214 = vld [vmem:[#allocation3 + $0x5c0] sm:$0xff]
    %v215 = vld [vmem:[#allocation3 + $0x5c8] sm:$0xff]
    %v216 = vld [vmem:[#allocation3 + $0x5d0] sm:$0xff]
    %v217 = vld [vmem:[#allocation3 + $0x5d8] sm:$0xff]
    %v218 = vld [vmem:[#allocation3 + $0x5e0] sm:$0xff]
    %v219 = vld [vmem:[#allocation3 + $0x5e8] sm:$0xff]
    %v220 = vld [vmem:[#allocation3 + $0x5f0] sm:$0xff]
    %v221 = vld [vmem:[#allocation3 + $0x5f8] sm:$0xff]
    %v222 = vld [vmem:[#allocation3 + $0x600] sm:$0xff]
    %v223 = vld [vmem:[#allocation3 + $0x608] sm:$0xff]
    %v224 = vld [vmem:[#allocation3 + $0x610] sm:$0xff]
    %v225 = vld [vmem:[#allocation3 + $0x618] sm:$0xff]
    %v226 = vld [vmem:[#allocation3 + $0x620] sm:$0xff]
    %v227 = vld [vmem:[#allocation3 + $0x628] sm:$0xff]
    %v228 = vld [vmem:[#allocation3 + $0x630] sm:$0xff]
    %v229 = vld [vmem:[#allocation3 + $0x638] sm:$0xff]
    %v230 = vld [vmem:[#allocation3 + $0x640] sm:$0xff]
    %v231 = vld [vmem:[#allocation3 + $0x648] sm:$0xff]
    %v232 = vld [vmem:[#allocation3 + $0x650] sm:$0xff]
    %v233 = vld [vmem:[#allocation3 + $0x658] sm:$0xff]
    %v234 = vld [vmem:[#allocation3 + $0x660] sm:$0xff]
    %v235 = vld [vmem:[#allocation3 + $0x668] sm:$0xff]
    %v236 = vld [vmem:[#allocation3 + $0x670] sm:$0xff]
    %v237 = vld [vmem:[#allocation3 + $0x678] sm:$0xff]
    %v238 = vld [vmem:[#allocation3 + $0x680] sm:$0xff]
    %v239 = vld [vmem:[#allocation3 + $0x688] sm:$0xff]
    %v240 = vld [vmem:[#allocation3 + $0x690] sm:$0xff]
    %v241 = vld [vmem:[#allocation3 + $0x698] sm:$0xff]
    %v242 = vld [vmem:[#allocation3 + $0x6a0] sm:$0xff]
    %v243 = vld [vmem:[#allocation3 + $0x6a8] sm:$0xff]
    %v244 = vld [vmem:[#allocation3 + $0x6b0] sm:$0xff]
    %v245 = vld [vmem:[#allocation3 + $0x6b8] sm:$0xff]
    %v246 = vld [vmem:[#allocation3 + $0x6c0] sm:$0xff]
    %v247 = vld [vmem:[#allocation3 + $0x6c8] sm:$0xff]
    %v248 = vld [vmem:[#allocation3 + $0x6d0] sm:$0xff]
    %v249 = vld [vmem:[#allocation3 + $0x6d8] sm:$0xff]
    %v250 = vld [vmem:[#allocation3 + $0x6e0] sm:$0xff]
    %v251 = vld [vmem:[#allocation3 + $0x6e8] sm:$0xff]
    %v252 = vld [vmem:[#allocation3 + $0x6f0] sm:$0xff]
    %v253 = vld [vmem:[#allocation3 + $0x6f8] sm:$0xff]
    %v254 = vld [vmem:[#allocation3 + $0x700] sm:$0xff]
    %v255 = vld [vmem:[#allocation3 + $0x708] sm:$0xff]
    %v256 = vld [vmem:[#allocation3 + $0x710] sm:$0xff]
    %v257 = vld [vmem:[#allocation3 + $0x718] sm:$0xff]
    %v258 = vld [vmem:[#allocation3 + $0x720] sm:$0xff]
    %v259 = vld [vmem:[#allocation3 + $0x728] sm:$0xff]
    %v260 = vld [vmem:[#allocation3 + $0x730] sm:$0xff]
    %v261 = vld [vmem:[#allocation3 + $0x738] sm:$0xff]
    %v262 = vld [vmem:[#allocation3 + $0x740] sm:$0xff]
    %v263 = vld [vmem:[#allocation3 + $0x748] sm:$0xff]
    %v264 = vld [vmem:[#allocation3 + $0x750] sm:$0xff]
    %v265 = vld [vmem:[#allocation3 + $0x758] sm:$0xff]
    %v266 = vld [vmem:[#allocation3 + $0x760] sm:$0xff]
    %v267 = vld [vmem:[#allocation3 + $0x768] sm:$0xff]
    %v268 = vld [vmem:[#allocation3 + $0x770] sm:$0xff]
    %v269 = vld [vmem:[#allocation3 + $0x778] sm:$0xff]
    %v270 = vstv %s29
    %v271 = vmul.f32 %v30, %v270
    %v272 = vmul.f32 %v31, %v270
    %v273 = vmul.f32 %v32, %v270
    %v274 = vmul.f32 %v33, %v270
    %v275 = vmul.f32 %v34, %v270
    %v276 = vmul.f32 %v35, %v270
    %v277 = vmul.f32 %v36, %v270
    %v278 = vmul.f32 %v37, %v270
    %v279 = vmul.f32 %v38, %v270
    %v280 = vmul.f32 %v39, %v270
    %v281 = vmul.f32 %v40, %v270
    %v282 = vmul.f32 %v41, %v270
    %v283 = vmul.f32 %v42, %v270
    %v284 = vmul.f32 %v43, %v270
    %v285 = vmul.f32 %v44, %v270
    %v286 = vmul.f32 %v45, %v270
    %v287 = vmul.f32 %v46, %v270
    %v288 = vmul.f32 %v47, %v270
    %v289 = vmul.f32 %v48, %v270
    %v290 = vmul.f32 %v49, %v270
    %v291 = vmul.f32 %v50, %v270
    %v292 = vmul.f32 %v51, %v270
    %v293 = vmul.f32 %v52, %v270
    %v294 = vmul.f32 %v53, %v270
    %v295 = vmul.f32 %v54, %v270
    %v296 = vmul.f32 %v55, %v270
    %v297 = vmul.f32 %v56, %v270
    %v298 = vmul.f32 %v57, %v270
    %v299 = vmul.f32 %v58, %v270
    %v300 = vmul.f32 %v59, %v270
    %v301 = vmul.f32 %v60, %v270
    %v302 = vmul.f32 %v61, %v270
    %v303 = vmul.f32 %v62, %v270
    %v304 = vmul.f32 %v63, %v270
    %v305 = vmul.f32 %v64, %v270
    %v306 = vmul.f32 %v65, %v270
    %v307 = vmul.f32 %v66, %v270
    %v308 = vmul.f32 %v67, %v270
    %v309 = vmul.f32 %v68, %v270
    %v310 = vmul.f32 %v69, %v270
    %v311 = vmul.f32 %v70, %v270
    %v312 = vmul.f32 %v71, %v270
    %v313 = vmul.f32 %v72, %v270
    %v314 = vmul.f32 %v73, %v270
    %v315 = vmul.f32 %v74, %v270
    %v316 = vmul.f32 %v75, %v270
    %v317 = vmul.f32 %v76, %v270
    %v318 = vmul.f32 %v77, %v270
    %v319 = vmul.f32 %v78, %v270
    %v320 = vmul.f32 %v79, %v270
    %v321 = vmul.f32 %v80, %v270
    %v322 = vmul.f32 %v81, %v270
    %v323 = vmul.f32 %v82, %v270
    %v324 = vmul.f32 %v83, %v270
    %v325 = vmul.f32 %v84, %v270
    %v326 = vmul.f32 %v85, %v270
    %v327 = vmul.f32 %v86, %v270
    %v328 = vmul.f32 %v87, %v270
    %v329 = vmul.f32 %v88, %v270
    %v330 = vmul.f32 %v89, %v270
    %v331 = vmul.f32 %v90, %v270
    %v332 = vmul.f32 %v91, %v270
    %v333 = vmul.f32 %v92, %v270
    %v334 = vmul.f32 %v93, %v270
    %v335 = vmul.f32 %v94, %v270
    %v336 = vmul.f32 %v95, %v270
    %v337 = vmul.f32 %v96, %v270
    %v338 = vmul.f32 %v97, %v270
    %v339 = vmul.f32 %v98, %v270
    %v340 = vmul.f32 %v99, %v270
    %v341 = vmul.f32 %v100, %v270
    %v342 = vmul.f32 %v101, %v270
    %v343 = vmul.f32 %v102, %v270
    %v344 = vmul.f32 %v103, %v270
    %v345 = vmul.f32 %v104, %v270
    %v346 = vmul.f32 %v105, %v270
    %v347 = vmul.f32 %v106, %v270
    %v348 = vmul.f32 %v107, %v270
    %v349 = vmul.f32 %v108, %v270
    %v350 = vmul.f32 %v109, %v270
    %v351 = vmul.f32 %v110, %v270
    %v352 = vmul.f32 %v111, %v270
    %v353 = vmul.f32 %v112, %v270
    %v354 = vmul.f32 %v113, %v270
    %v355 = vmul.f32 %v114, %v270
    %v356 = vmul.f32 %v115, %v270
    %v357 = vmul.f32 %v116, %v270
    %v358 = vmul.f32 %v117, %v270
    %v359 = vmul.f32 %v118, %v270
    %v360 = vmul.f32 %v119, %v270
    %v361 = vmul.f32 %v120, %v270
    %v362 = vmul.f32 %v121, %v270
    %v363 = vmul.f32 %v122, %v270
    %v364 = vmul.f32 %v123, %v270
    %v365 = vmul.f32 %v124, %v270
    %v366 = vmul.f32 %v125, %v270
    %v367 = vmul.f32 %v126, %v270
    %v368 = vmul.f32 %v127, %v270
    %v369 = vmul.f32 %v128, %v270
    %v370 = vmul.f32 %v129, %v270
    %v371 = vmul.f32 %v130, %v270
    %v372 = vmul.f32 %v131, %v270
    %v373 = vmul.f32 %v132, %v270
    %v374 = vmul.f32 %v133, %v270
    %v375 = vmul.f32 %v134, %v270
    %v376 = vmul.f32 %v135, %v270
    %v377 = vmul.f32 %v136, %v270
    %v378 = vmul.f32 %v137, %v270
    %v379 = vmul.f32 %v138, %v270
    %v380 = vmul.f32 %v139, %v270
    %v381 = vmul.f32 %v140, %v270
    %v382 = vmul.f32 %v141, %v270
    %v383 = vmul.f32 %v142, %v270
    %v384 = vmul.f32 %v143, %v270
    %v385 = vmul.f32 %v144, %v270
    %v386 = vmul.f32 %v145, %v270
    %v387 = vmul.f32 %v146, %v270
    %v388 = vmul.f32 %v147, %v270
    %v389 = vmul.f32 %v148, %v270
    %v390 = vmul.f32 %v149, %v270
    %v391 = vmul.f32 %v150, %v270
    %v392 = vmul.f32 %v151, %v270
    %v393 = vmul.f32 %v152, %v270
    %v394 = vmul.f32 %v153, %v270
    %v395 = vmul.f32 %v154, %v270
    %v396 = vmul.f32 %v155, %v270
    %v397 = vmul.f32 %v156, %v270
    %v398 = vmul.f32 %v157, %v270
    %v399 = vmul.f32 %v158, %v270
    %v400 = vmul.f32 %v159, %v270
    %v401 = vmul.f32 %v160, %v270
    %v402 = vmul.f32 %v161, %v270
    %v403 = vmul.f32 %v162, %v270
    %v404 = vmul.f32 %v163, %v270
    %v405 = vmul.f32 %v164, %v270
    %v406 = vmul.f32 %v165, %v270
    %v407 = vmul.f32 %v166, %v270
    %v408 = vmul.f32 %v167, %v270
    %v409 = vmul.f32 %v168, %v270
    %v410 = vmul.f32 %v169, %v270
    %v411 = vmul.f32 %v170, %v270
    %v412 = vmul.f32 %v171, %v270
    %v413 = vmul.f32 %v172, %v270
    %v414 = vmul.f32 %v173, %v270
    %v415 = vmul.f32 %v174, %v270
    %v416 = vmul.f32 %v175, %v270
    %v417 = vmul.f32 %v176, %v270
    %v418 = vmul.f32 %v177, %v270
    %v419 = vmul.f32 %v178, %v270
    %v420 = vmul.f32 %v179, %v270
    %v421 = vmul.f32 %v180, %v270
    %v422 = vmul.f32 %v181, %v270
    %v423 = vmul.f32 %v182, %v270
    %v424 = vmul.f32 %v183, %v270
    %v425 = vmul.f32 %v184, %v270
    %v426 = vmul.f32 %v185, %v270
    %v427 = vmul.f32 %v186, %v270
    %v428 = vmul.f32 %v187, %v270
    %v429 = vmul.f32 %v188, %v270
    %v430 = vmul.f32 %v189, %v270
    %v431 = vmul.f32 %v190, %v270
    %v432 = vmul.f32 %v191, %v270
    %v433 = vmul.f32 %v192, %v270
    %v434 = vmul.f32 %v193, %v270
    %v435 = vmul.f32 %v194, %v270
    %v436 = vmul.f32 %v195, %v270
    %v437 = vmul.f32 %v196, %v270
    %v438 = vmul.f32 %v197, %v270
    %v439 = vmul.f32 %v198, %v270
    %v440 = vmul.f32 %v199, %v270
    %v441 = vmul.f32 %v200, %v270
    %v442 = vmul.f32 %v201, %v270
    %v443 = vmul.f32 %v202, %v270
    %v444 = vmul.f32 %v203, %v270
    %v445 = vmul.f32 %v204, %v270
    %v446 = vmul.f32 %v205, %v270
    %v447 = vmul.f32 %v206, %v270
    %v448 = vmul.f32 %v207, %v270
    %v449 = vmul.f32 %v208, %v270
    %v450 = vmul.f32 %v209, %v270
    %v451 = vmul.f32 %v210, %v270
    %v452 = vmul.f32 %v211, %v270
    %v453 = vmul.f32 %v212, %v270
    %v454 = vmul.f32 %v213, %v270
    %v455 = vmul.f32 %v214, %v270
    %v456 = vmul.f32 %v215, %v270
    %v457 = vmul.f32 %v216, %v270
    %v458 = vmul.f32 %v217, %v270
    %v459 = vmul.f32 %v218, %v270
    %v460 = vmul.f32 %v219, %v270
    %v461 = vmul.f32 %v220, %v270
    %v462 = vmul.f32 %v221, %v270
    %v463 = vmul.f32 %v222, %v270
    %v464 = vmul.f32 %v223, %v270
    %v465 = vmul.f32 %v224, %v270
    %v466 = vmul.f32 %v225, %v270
    %v467 = vmul.f32 %v226, %v270
    %v468 = vmul.f32 %v227, %v270
    %v469 = vmul.f32 %v228, %v270
    %v470 = vmul.f32 %v229, %v270
    %v471 = vmul.f32 %v230, %v270
    %v472 = vmul.f32 %v231, %v270
    %v473 = vmul.f32 %v232, %v270
    %v474 = vmul.f32 %v233, %v270
    %v475 = vmul.f32 %v234, %v270
    %v476 = vmul.f32 %v235, %v270
    %v477 = vmul.f32 %v236, %v270
    %v478 = vmul.f32 %v237, %v270
    %v479 = vmul.f32 %v238, %v270
    %v480 = vmul.f32 %v239, %v270
    %v481 = vmul.f32 %v240, %v270
    %v482 = vmul.f32 %v241, %v270
    %v483 = vmul.f32 %v242, %v270
    %v484 = vmul.f32 %v243, %v270
    %v485 = vmul.f32 %v244, %v270
    %v486 = vmul.f32 %v245, %v270
    %v487 = vmul.f32 %v246, %v270
    %v488 = vmul.f32 %v247, %v270
    %v489 = vmul.f32 %v248, %v270
    %v490 = vmul.f32 %v249, %v270
    %v491 = vmul.f32 %v250, %v270
    %v492 = vmul.f32 %v251, %v270
    %v493 = vmul.f32 %v252, %v270
    %v494 = vmul.f32 %v253, %v270
    %v495 = vmul.f32 %v254, %v270
    %v496 = vmul.f32 %v255, %v270
    %v497 = vmul.f32 %v256, %v270
    %v498 = vmul.f32 %v257, %v270
    %v499 = vmul.f32 %v258, %v270
    %v500 = vmul.f32 %v259, %v270
    %v501 = vmul.f32 %v260, %v270
    %v502 = vmul.f32 %v261, %v270
    %v503 = vmul.f32 %v262, %v270
    %v504 = vmul.f32 %v263, %v270
    %v505 = vmul.f32 %v264, %v270
    %v506 = vmul.f32 %v265, %v270
    %v507 = vmul.f32 %v266, %v270
    %v508 = vmul.f32 %v267, %v270
    %v509 = vmul.f32 %v268, %v270
    %v510 = vmul.f32 %v269, %v270
    %511 = vst [vmem:[#allocation6] sm:$0xff] %v271
    %512 = vst [vmem:[#allocation6 + $0x8] sm:$0xff] %v272
    %513 = vst [vmem:[#allocation6 + $0x10] sm:$0xff] %v273
    %514 = vst [vmem:[#allocation6 + $0x18] sm:$0xff] %v274
    %515 = vst [vmem:[#allocation6 + $0x20] sm:$0xff] %v275
    %516 = vst [vmem:[#allocation6 + $0x28] sm:$0xff] %v276
    %517 = vst [vmem:[#allocation6 + $0x30] sm:$0xff] %v277
    %518 = vst [vmem:[#allocation6 + $0x38] sm:$0xff] %v278
    %519 = vst [vmem:[#allocation6 + $0x40] sm:$0xff] %v279
    %520 = vst [vmem:[#allocation6 + $0x48] sm:$0xff] %v280
    %521 = vst [vmem:[#allocation6 + $0x50] sm:$0xff] %v281
    %522 = vst [vmem:[#allocation6 + $0x58] sm:$0xff] %v282
    %523 = vst [vmem:[#allocation6 + $0x60] sm:$0xff] %v283
    %524 = vst [vmem:[#allocation6 + $0x68] sm:$0xff] %v284
    %525 = vst [vmem:[#allocation6 + $0x70] sm:$0xff] %v285
    %526 = vst [vmem:[#allocation6 + $0x78] sm:$0xff] %v286
    %527 = vst [vmem:[#allocation6 + $0x80] sm:$0xff] %v287
    %528 = vst [vmem:[#allocation6 + $0x88] sm:$0xff] %v288
    %529 = vst [vmem:[#allocation6 + $0x90] sm:$0xff] %v289
    %530 = vst [vmem:[#allocation6 + $0x98] sm:$0xff] %v290
    %531 = vst [vmem:[#allocation6 + $0xa0] sm:$0xff] %v291
    %532 = vst [vmem:[#allocation6 + $0xa8] sm:$0xff] %v292
    %533 = vst [vmem:[#allocation6 + $0xb0] sm:$0xff] %v293
    %534 = vst [vmem:[#allocation6 + $0xb8] sm:$0xff] %v294
    %535 = vst [vmem:[#allocation6 + $0xc0] sm:$0xff] %v295
    %536 = vst [vmem:[#allocation6 + $0xc8] sm:$0xff] %v296
    %537 = vst [vmem:[#allocation6 + $0xd0] sm:$0xff] %v297
    %538 = vst [vmem:[#allocation6 + $0xd8] sm:$0xff] %v298
    %539 = vst [vmem:[#allocation6 + $0xe0] sm:$0xff] %v299
    %540 = vst [vmem:[#allocation6 + $0xe8] sm:$0xff] %v300
    %541 = vst [vmem:[#allocation6 + $0xf0] sm:$0xff] %v301
    %542 = vst [vmem:[#allocation6 + $0xf8] sm:$0xff] %v302
    %543 = vst [vmem:[#allocation6 + $0x100] sm:$0xff] %v303
    %544 = vst [vmem:[#allocation6 + $0x108] sm:$0xff] %v304
    %545 = vst [vmem:[#allocation6 + $0x110] sm:$0xff] %v305
    %546 = vst [vmem:[#allocation6 + $0x118] sm:$0xff] %v306
    %547 = vst [vmem:[#allocation6 + $0x120] sm:$0xff] %v307
    %548 = vst [vmem:[#allocation6 + $0x128] sm:$0xff] %v308
    %549 = vst [vmem:[#allocation6 + $0x130] sm:$0xff] %v309
    %550 = vst [vmem:[#allocation6 + $0x138] sm:$0xff] %v310
    %551 = vst [vmem:[#allocation6 + $0x140] sm:$0xff] %v311
    %552 = vst [vmem:[#allocation6 + $0x148] sm:$0xff] %v312
    %553 = vst [vmem:[#allocation6 + $0x150] sm:$0xff] %v313
    %554 = vst [vmem:[#allocation6 + $0x158] sm:$0xff] %v314
    %555 = vst [vmem:[#allocation6 + $0x160] sm:$0xff] %v315
    %556 = vst [vmem:[#allocation6 + $0x168] sm:$0xff] %v316
    %557 = vst [vmem:[#allocation6 + $0x170] sm:$0xff] %v317
    %558 = vst [vmem:[#allocation6 + $0x178] sm:$0xff] %v318
    %559 = vst [vmem:[#allocation6 + $0x180] sm:$0xff] %v319
    %560 = vst [vmem:[#allocation6 + $0x188] sm:$0xff] %v320
    %561 = vst [vmem:[#allocation6 + $0x190] sm:$0xff] %v321
    %562 = vst [vmem:[#allocation6 + $0x198] sm:$0xff] %v322
    %563 = vst [vmem:[#allocation6 + $0x1a0] sm:$0xff] %v323
    %564 = vst [vmem:[#allocation6 + $0x1a8] sm:$0xff] %v324
    %565 = vst [vmem:[#allocation6 + $0x1b0] sm:$0xff] %v325
    %566 = vst [vmem:[#allocation6 + $0x1b8] sm:$0xff] %v326
    %567 = vst [vmem:[#allocation6 + $0x1c0] sm:$0xff] %v327
    %568 = vst [vmem:[#allocation6 + $0x1c8] sm:$0xff] %v328
    %569 = vst [vmem:[#allocation6 + $0x1d0] sm:$0xff] %v329
    %570 = vst [vmem:[#allocation6 + $0x1d8] sm:$0xff] %v330
    %571 = vst [vmem:[#allocation6 + $0x1e0] sm:$0xff] %v331
    %572 = vst [vmem:[#allocation6 + $0x1e8] sm:$0xff] %v332
    %573 = vst [vmem:[#allocation6 + $0x1f0] sm:$0xff] %v333
    %574 = vst [vmem:[#allocation6 + $0x1f8] sm:$0xff] %v334
    %575 = vst [vmem:[#allocation6 + $0x200] sm:$0xff] %v335
    %576 = vst [vmem:[#allocation6 + $0x208] sm:$0xff] %v336
    %577 = vst [vmem:[#allocation6 + $0x210] sm:$0xff] %v337
    %578 = vst [vmem:[#allocation6 + $0x218] sm:$0xff] %v338
    %579 = vst [vmem:[#allocation6 + $0x220] sm:$0xff] %v339
    %580 = vst [vmem:[#allocation6 + $0x228] sm:$0xff] %v340
    %581 = vst [vmem:[#allocation6 + $0x230] sm:$0xff] %v341
    %582 = vst [vmem:[#allocation6 + $0x238] sm:$0xff] %v342
    %583 = vst [vmem:[#allocation6 + $0x240] sm:$0xff] %v343
    %584 = vst [vmem:[#allocation6 + $0x248] sm:$0xff] %v344
    %585 = vst [vmem:[#allocation6 + $0x250] sm:$0xff] %v345
    %586 = vst [vmem:[#allocation6 + $0x258] sm:$0xff] %v346
    %587 = vst [vmem:[#allocation6 + $0x260] sm:$0xff] %v347
    %588 = vst [vmem:[#allocation6 + $0x268] sm:$0xff] %v348
    %589 = vst [vmem:[#allocation6 + $0x270] sm:$0xff] %v349
    %590 = vst [vmem:[#allocation6 + $0x278] sm:$0xff] %v350
    %591 = vst [vmem:[#allocation6 + $0x280] sm:$0xff] %v351
    %592 = vst [vmem:[#allocation6 + $0x288] sm:$0xff] %v352
    %593 = vst [vmem:[#allocation6 + $0x290] sm:$0xff] %v353
    %594 = vst [vmem:[#allocation6 + $0x298] sm:$0xff] %v354
    %595 = vst [vmem:[#allocation6 + $0x2a0] sm:$0xff] %v355
    %596 = vst [vmem:[#allocation6 + $0x2a8] sm:$0xff] %v356
    %597 = vst [vmem:[#allocation6 + $0x2b0] sm:$0xff] %v357
    %598 = vst [vmem:[#allocation6 + $0x2b8] sm:$0xff] %v358
    %599 = vst [vmem:[#allocation6 + $0x2c0] sm:$0xff] %v359
    %600 = vst [vmem:[#allocation6 + $0x2c8] sm:$0xff] %v360
    %601 = vst [vmem:[#allocation6 + $0x2d0] sm:$0xff] %v361
    %602 = vst [vmem:[#allocation6 + $0x2d8] sm:$0xff] %v362
    %603 = vst [vmem:[#allocation6 + $0x2e0] sm:$0xff] %v363
    %604 = vst [vmem:[#allocation6 + $0x2e8] sm:$0xff] %v364
    %605 = vst [vmem:[#allocation6 + $0x2f0] sm:$0xff] %v365
    %606 = vst [vmem:[#allocation6 + $0x2f8] sm:$0xff] %v366
    %607 = vst [vmem:[#allocation6 + $0x300] sm:$0xff] %v367
    %608 = vst [vmem:[#allocation6 + $0x308] sm:$0xff] %v368
    %609 = vst [vmem:[#allocation6 + $0x310] sm:$0xff] %v369
    %610 = vst [vmem:[#allocation6 + $0x318] sm:$0xff] %v370
    %611 = vst [vmem:[#allocation6 + $0x320] sm:$0xff] %v371
    %612 = vst [vmem:[#allocation6 + $0x328] sm:$0xff] %v372
    %613 = vst [vmem:[#allocation6 + $0x330] sm:$0xff] %v373
    %614 = vst [vmem:[#allocation6 + $0x338] sm:$0xff] %v374
    %615 = vst [vmem:[#allocation6 + $0x340] sm:$0xff] %v375
    %616 = vst [vmem:[#allocation6 + $0x348] sm:$0xff] %v376
    %617 = vst [vmem:[#allocation6 + $0x350] sm:$0xff] %v377
    %618 = vst [vmem:[#allocation6 + $0x358] sm:$0xff] %v378
    %619 = vst [vmem:[#allocation6 + $0x360] sm:$0xff] %v379
    %620 = vst [vmem:[#allocation6 + $0x368] sm:$0xff] %v380
    %621 = vst [vmem:[#allocation6 + $0x370] sm:$0xff] %v381
    %622 = vst [vmem:[#allocation6 + $0x378] sm:$0xff] %v382
    %623 = vst [vmem:[#allocation6 + $0x380] sm:$0xff] %v383
    %624 = vst [vmem:[#allocation6 + $0x388] sm:$0xff] %v384
    %625 = vst [vmem:[#allocation6 + $0x390] sm:$0xff] %v385
    %626 = vst [vmem:[#allocation6 + $0x398] sm:$0xff] %v386
    %627 = vst [vmem:[#allocation6 + $0x3a0] sm:$0xff] %v387
    %628 = vst [vmem:[#allocation6 + $0x3a8] sm:$0xff] %v388
    %629 = vst [vmem:[#allocation6 + $0x3b0] sm:$0xff] %v389
    %630 = vst [vmem:[#allocation6 + $0x3b8] sm:$0xff] %v390
    %631 = vst [vmem:[#allocation6 + $0x3c0] sm:$0xff] %v391
    %632 = vst [vmem:[#allocation6 + $0x3c8] sm:$0xff] %v392
    %633 = vst [vmem:[#allocation6 + $0x3d0] sm:$0xff] %v393
    %634 = vst [vmem:[#allocation6 + $0x3d8] sm:$0xff] %v394
    %635 = vst [vmem:[#allocation6 + $0x3e0] sm:$0xff] %v395
    %636 = vst [vmem:[#allocation6 + $0x3e8] sm:$0xff] %v396
    %637 = vst [vmem:[#allocation6 + $0x3f0] sm:$0xff] %v397
    %638 = vst [vmem:[#allocation6 + $0x3f8] sm:$0xff] %v398
    %639 = vst [vmem:[#allocation6 + $0x400] sm:$0xff] %v399
    %640 = vst [vmem:[#allocation6 + $0x408] sm:$0xff] %v400
    %641 = vst [vmem:[#allocation6 + $0x410] sm:$0xff] %v401
    %642 = vst [vmem:[#allocation6 + $0x418] sm:$0xff] %v402
    %643 = vst [vmem:[#allocation6 + $0x420] sm:$0xff] %v403
    %644 = vst [vmem:[#allocation6 + $0x428] sm:$0xff] %v404
    %645 = vst [vmem:[#allocation6 + $0x430] sm:$0xff] %v405
    %646 = vst [vmem:[#allocation6 + $0x438] sm:$0xff] %v406
    %647 = vst [vmem:[#allocation6 + $0x440] sm:$0xff] %v407
    %648 = vst [vmem:[#allocation6 + $0x448] sm:$0xff] %v408
    %649 = vst [vmem:[#allocation6 + $0x450] sm:$0xff] %v409
    %650 = vst [vmem:[#allocation6 + $0x458] sm:$0xff] %v410
    %651 = vst [vmem:[#allocation6 + $0x460] sm:$0xff] %v411
    %652 = vst [vmem:[#allocation6 + $0x468] sm:$0xff] %v412
    %653 = vst [vmem:[#allocation6 + $0x470] sm:$0xff] %v413
    %654 = vst [vmem:[#allocation6 + $0x478] sm:$0xff] %v414
    %655 = vst [vmem:[#allocation6 + $0x480] sm:$0xff] %v415
    %656 = vst [vmem:[#allocation6 + $0x488] sm:$0xff] %v416
    %657 = vst [vmem:[#allocation6 + $0x490] sm:$0xff] %v417
    %658 = vst [vmem:[#allocation6 + $0x498] sm:$0xff] %v418
    %659 = vst [vmem:[#allocation6 + $0x4a0] sm:$0xff] %v419
    %660 = vst [vmem:[#allocation6 + $0x4a8] sm:$0xff] %v420
    %661 = vst [vmem:[#allocation6 + $0x4b0] sm:$0xff] %v421
    %662 = vst [vmem:[#allocation6 + $0x4b8] sm:$0xff] %v422
    %663 = vst [vmem:[#allocation6 + $0x4c0] sm:$0xff] %v423
    %664 = vst [vmem:[#allocation6 + $0x4c8] sm:$0xff] %v424
    %665 = vst [vmem:[#allocation6 + $0x4d0] sm:$0xff] %v425
    %666 = vst [vmem:[#allocation6 + $0x4d8] sm:$0xff] %v426
    %667 = vst [vmem:[#allocation6 + $0x4e0] sm:$0xff] %v427
    %668 = vst [vmem:[#allocation6 + $0x4e8] sm:$0xff] %v428
    %669 = vst [vmem:[#allocation6 + $0x4f0] sm:$0xff] %v429
    %670 = vst [vmem:[#allocation6 + $0x4f8] sm:$0xff] %v430
    %671 = vst [vmem:[#allocation6 + $0x500] sm:$0xff] %v431
    %672 = vst [vmem:[#allocation6 + $0x508] sm:$0xff] %v432
    %673 = vst [vmem:[#allocation6 + $0x510] sm:$0xff] %v433
    %674 = vst [vmem:[#allocation6 + $0x518] sm:$0xff] %v434
    %675 = vst [vmem:[#allocation6 + $0x520] sm:$0xff] %v435
    %676 = vst [vmem:[#allocation6 + $0x528] sm:$0xff] %v436
    %677 = vst [vmem:[#allocation6 + $0x530] sm:$0xff] %v437
    %678 = vst [vmem:[#allocation6 + $0x538] sm:$0xff] %v438
    %679 = vst [vmem:[#allocation6 + $0x540] sm:$0xff] %v439
    %680 = vst [vmem:[#allocation6 + $0x548] sm:$0xff] %v440
    %681 = vst [vmem:[#allocation6 + $0x550] sm:$0xff] %v441
    %682 = vst [vmem:[#allocation6 + $0x558] sm:$0xff] %v442
    %683 = vst [vmem:[#allocation6 + $0x560] sm:$0xff] %v443
    %684 = vst [vmem:[#allocation6 + $0x568] sm:$0xff] %v444
    %685 = vst [vmem:[#allocation6 + $0x570] sm:$0xff] %v445
    %686 = vst [vmem:[#allocation6 + $0x578] sm:$0xff] %v446
    %687 = vst [vmem:[#allocation6 + $0x580] sm:$0xff] %v447
    %688 = vst [vmem:[#allocation6 + $0x588] sm:$0xff] %v448
    %689 = vst [vmem:[#allocation6 + $0x590] sm:$0xff] %v449
    %690 = vst [vmem:[#allocation6 + $0x598] sm:$0xff] %v450
    %691 = vst [vmem:[#allocation6 + $0x5a0] sm:$0xff] %v451
    %692 = vst [vmem:[#allocation6 + $0x5a8] sm:$0xff] %v452
    %693 = vst [vmem:[#allocation6 + $0x5b0] sm:$0xff] %v453
    %694 = vst [vmem:[#allocation6 + $0x5b8] sm:$0xff] %v454
    %695 = vst [vmem:[#allocation6 + $0x5c0] sm:$0xff] %v455
    %696 = vst [vmem:[#allocation6 + $0x5c8] sm:$0xff] %v456
    %697 = vst [vmem:[#allocation6 + $0x5d0] sm:$0xff] %v457
    %698 = vst [vmem:[#allocation6 + $0x5d8] sm:$0xff] %v458
    %699 = vst [vmem:[#allocation6 + $0x5e0] sm:$0xff] %v459
    %700 = vst [vmem:[#allocation6 + $0x5e8] sm:$0xff] %v460
    %701 = vst [vmem:[#allocation6 + $0x5f0] sm:$0xff] %v461
    %702 = vst [vmem:[#allocation6 + $0x5f8] sm:$0xff] %v462
    %703 = vst [vmem:[#allocation6 + $0x600] sm:$0xff] %v463
    %704 = vst [vmem:[#allocation6 + $0x608] sm:$0xff] %v464
    %705 = vst [vmem:[#allocation6 + $0x610] sm:$0xff] %v465
    %706 = vst [vmem:[#allocation6 + $0x618] sm:$0xff] %v466
    %707 = vst [vmem:[#allocation6 + $0x620] sm:$0xff] %v467
    %708 = vst [vmem:[#allocation6 + $0x628] sm:$0xff] %v468
    %709 = vst [vmem:[#allocation6 + $0x630] sm:$0xff] %v469
    %710 = vst [vmem:[#allocation6 + $0x638] sm:$0xff] %v470
    %711 = vst [vmem:[#allocation6 + $0x640] sm:$0xff] %v471
    %712 = vst [vmem:[#allocation6 + $0x648] sm:$0xff] %v472
    %713 = vst [vmem:[#allocation6 + $0x650] sm:$0xff] %v473
    %714 = vst [vmem:[#allocation6 + $0x658] sm:$0xff] %v474
    %715 = vst [vmem:[#allocation6 + $0x660] sm:$0xff] %v475
    %716 = vst [vmem:[#allocation6 + $0x668] sm:$0xff] %v476
    %717 = vst [vmem:[#allocation6 + $0x670] sm:$0xff] %v477
    %718 = vst [vmem:[#allocation6 + $0x678] sm:$0xff] %v478
    %719 = vst [vmem:[#allocation6 + $0x680] sm:$0xff] %v479
    %720 = vst [vmem:[#allocation6 + $0x688] sm:$0xff] %v480
    %721 = vst [vmem:[#allocation6 + $0x690] sm:$0xff] %v481
    %722 = vst [vmem:[#allocation6 + $0x698] sm:$0xff] %v482
    %723 = vst [vmem:[#allocation6 + $0x6a0] sm:$0xff] %v483
    %724 = vst [vmem:[#allocation6 + $0x6a8] sm:$0xff] %v484
    %725 = vst [vmem:[#allocation6 + $0x6b0] sm:$0xff] %v485
    %726 = vst [vmem:[#allocation6 + $0x6b8] sm:$0xff] %v486
    %727 = vst [vmem:[#allocation6 + $0x6c0] sm:$0xff] %v487
    %728 = vst [vmem:[#allocation6 + $0x6c8] sm:$0xff] %v488
    %729 = vst [vmem:[#allocation6 + $0x6d0] sm:$0xff] %v489
    %730 = vst [vmem:[#allocation6 + $0x6d8] sm:$0xff] %v490
    %731 = vst [vmem:[#allocation6 + $0x6e0] sm:$0xff] %v491
    %732 = vst [vmem:[#allocation6 + $0x6e8] sm:$0xff] %v492
    %733 = vst [vmem:[#allocation6 + $0x6f0] sm:$0xff] %v493
    %734 = vst [vmem:[#allocation6 + $0x6f8] sm:$0xff] %v494
    %735 = vst [vmem:[#allocation6 + $0x700] sm:$0xff] %v495
    %736 = vst [vmem:[#allocation6 + $0x708] sm:$0xff] %v496
    %737 = vst [vmem:[#allocation6 + $0x710] sm:$0xff] %v497
    %738 = vst [vmem:[#allocation6 + $0x718] sm:$0xff] %v498
    %739 = vst [vmem:[#allocation6 + $0x720] sm:$0xff] %v499
    %740 = vst [vmem:[#allocation6 + $0x728] sm:$0xff] %v500
    %741 = vst [vmem:[#allocation6 + $0x730] sm:$0xff] %v501
    %742 = vst [vmem:[#allocation6 + $0x738] sm:$0xff] %v502
    %743 = vst [vmem:[#allocation6 + $0x740] sm:$0xff] %v503
    %744 = vst [vmem:[#allocation6 + $0x748] sm:$0xff] %v504
    %745 = vst [vmem:[#allocation6 + $0x750] sm:$0xff] %v505
    %746 = vst [vmem:[#allocation6 + $0x758] sm:$0xff] %v506
    %747 = vst [vmem:[#allocation6 + $0x760] sm:$0xff] %v507
    %748 = vst [vmem:[#allocation6 + $0x768] sm:$0xff] %v508
    %749 = vst [vmem:[#allocation6 + $0x770] sm:$0xff] %v509
    %750 = vst [vmem:[#allocation6 + $0x778] sm:$0xff] %v510
    // Predicated region
    $region14: #{tpu_custom_call.1} parent=1 // pred_check
      _
    $region15: #{tpu_custom_call.1} parent=1 // pred_check_branch
      %752 = sbr.rel (0) target = $region17
    $region16: #{tpu_custom_call.1} parent=1 // pred_region
      %754 = vsyncadd [#allocation5], 0
      %s755 = sshll.u32 [#allocation6], 4
      %s756 = int_to_ptr.vmem [resolvable:$true] %s755
      %s757 = sshll.u32 %s2, 4
      %s758 = int_to_ptr.hbm [resolvable:$true] %s757
      %763 = dma.vmem_to_hbm [thread:$0]  %s756, 30720, %s758, [#allocation5], 1024, 1024, 64
    $region17: #{tpu_custom_call.1} parent=1 // pred_fallthru
      _
    // Predicated region
    $region18: #{tpu_custom_call.1} parent=1 // pred_check
      _
    $region19: #{tpu_custom_call.1} parent=1 // pred_check_branch
      %765 = sbr.rel (0) target = $region21
    $region20: #{tpu_custom_call.1} parent=1 // pred_region
      %767 = dma.done [#allocation5], 30720
    $region21: #{tpu_custom_call.1} parent=1 // pred_fallthru
      _
    %768 = vsyncpa [#allocation4], 1
    %769 = vsyncpa [#allocation5], 1

</llo_original>
